<compile_context>
chip_gen: v6e
topology: v6e:2x2x1
jax: 0.10.0
libtpu: 0.0.40
codegen_flags: <defaults>
</compile_context>

<pallas_src>
import jax
import jax.numpy as jnp
from jax import lax
from jax.experimental import pallas as pl
from jax.experimental.pallas import tpu as pltpu

NUM_LABELS = 30   # self.num_labels
NUM_BIN = 3       # binary_classifier output dim in AuxiliaryModel2WithRBERT
LANE = 128        # lane width; each classifier head owns one 128-lane block


# ----------------------------------------------------------------------------
# Kernel 1: streamed entity-sum accumulation (HBM-bandwidth bound phase).
# ----------------------------------------------------------------------------
def entity_sum_kernel(masks_ref, seq_ref, sum_ref, acc_ref):
    si = pl.program_id(1)

    @pl.when(si == 0)
    def _init():
        acc_ref[...] = jnp.zeros_like(acc_ref)

    # One batched MXU contraction over S (bf16 inputs, f32 accumulate): seq is
    # read exactly once; the reduction happens inside the systolic array.
    acc_ref[...] += jnp.einsum('bks,bsh->bkh', masks_ref[...], seq_ref[...],
                               preferred_element_type=jnp.float32)

    @pl.when(si == pl.num_programs(1) - 1)
    def _store():
        sum_ref[...] = acc_ref[...]


# ----------------------------------------------------------------------------
# Kernel 2: head — entity average, FC layers, fused classifiers, routing.
# ----------------------------------------------------------------------------
def rbert_head_kernel(pooled_ref, esum_ref, einv_ref,
                      wcls_ref, bcls_ref, went_ref, bent_ref,
                      wall_ref, ball_ref,
                      out_ref,
                      e12_scratch, t_scratch):
    bt = pooled_ref.shape[0]
    h = pooled_ref.shape[1]

    # entity_average: sums * 1/max(len,1)   (inv_len precomputed in wrapper;
    # torch original would NaN on an all-zero mask — documented deviation).
    avg = esum_ref[...] * einv_ref[...]                       # [bt, 4, H]

    def take(k):                                              # -> [bt, H]
        return jnp.sum(avg[:, k:k + 1, :], axis=1)

    e1, e2, e3, e4 = take(0), take(1), take(2), take(3)
    pooled = pooled_ref[...].astype(jnp.float32)

    # cls_fc_layer: tanh -> linear.
    pooled_fc = jnp.dot(jnp.tanh(pooled), wcls_ref[...],
                        preferred_element_type=jnp.float32) + bcls_ref[...]

    # entity_fc_layer on e1 and e2, fused into a single [2*bt, H] matmul
    # (one MXU weight push/drain instead of two tiny ones).
    e12_scratch[0:bt, :] = jnp.tanh(e1)
    e12_scratch[bt:2 * bt, :] = jnp.tanh(e2)
    e12_fc = jnp.dot(e12_scratch[...], went_ref[...],
                     preferred_element_type=jnp.float32) + bent_ref[...]

    # t = tanh(cat([pooled_fc, e1_fc, e2_fc, e3, e4], -1)): lane-concat via
    # static slice stores into a VMEM scratch.  Note e3/e4 bypass the entity
    # FC, exactly as in get_classifier_input.
    t_scratch[:, 0 * h:1 * h] = jnp.tanh(pooled_fc)
    t_scratch[:, 1 * h:2 * h] = jnp.tanh(e12_fc[0:bt, :])
    t_scratch[:, 2 * h:3 * h] = jnp.tanh(e12_fc[bt:2 * bt, :])
    t_scratch[:, 3 * h:4 * h] = jnp.tanh(e3)
    t_scratch[:, 4 * h:5 * h] = jnp.tanh(e4)

    # Single fused classifier matmul: [bt,5H] x [5H, 4*128] + one bias row.
    fused = jnp.dot(t_scratch[...], wall_ref[...],
                    preferred_element_type=jnp.float32) + ball_ref[...]

    # ---- argmax routing (first-max tie-break, like torch.argmax) ------------
    bin_blk = fused[:, 0:LANE]                                # 3 valid lanes
    lane = lax.broadcasted_iota(jnp.int32, (bt, LANE), 1)
    valid = lane < NUM_BIN
    mx = jnp.max(jnp.where(valid, bin_blk, -jnp.inf), axis=1, keepdims=True)
    lab = jnp.min(jnp.where((bin_blk == mx) & valid, lane, LANE),
                  axis=1, keepdims=True)                      # [bt, 1]
    # NOTE: if a binary logit is NaN, lab == LANE falls through to head 2.

    sel = jnp.where(lab == 0, fused[:, 1 * LANE:2 * LANE],
          jnp.where(lab == 1, fused[:, 2 * LANE:3 * LANE],
                              fused[:, 3 * LANE:4 * LANE]))

    # Lane-dense output slab: [bin block | selected-label block].
    out_ref[:, 0:LANE] = bin_blk
    out_ref[:, LANE:2 * LANE] = sel


# ----------------------------------------------------------------------------
# Wrapper helpers.
# ----------------------------------------------------------------------------
def _largest_divisor_leq(n, cap):
    cap = max(1, min(n, cap))
    for t in range(cap, 0, -1):
        if n % t == 0:
            return t
    return 1


def pack_classifier_params(params, dtype=jnp.float32):
    """Fuse binary + 3 label classifier weights into one [5H, 4*128] slab,
    each head in its own 128-lane block (padding lanes zero).  Call once and
    cache; do NOT rebuild per forward call."""
    H = params["w_cls"].shape[0]
    w_bin = params["w_bin"].reshape(5 * H, NUM_BIN)
    w_lbl = params["w_lbl"].reshape(3, 5 * H, NUM_LABELS)
    w_all = jnp.zeros((5 * H, 4 * LANE), dtype)
    b_all = jnp.zeros((1, 4 * LANE), jnp.float32)
    w_all = w_all.at[:, 0:NUM_BIN].set(w_bin.astype(dtype))
    b_all = b_all.at[:, 0:NUM_BIN].set(params["b_bin"])
    for c in range(3):
        lo = (c + 1) * LANE
        w_all = w_all.at[:, lo:lo + NUM_LABELS].set(w_lbl[c].astype(dtype))
        b_all = b_all.at[:, lo:lo + NUM_LABELS].set(params["b_lbl"][c])
    return w_all, b_all


def rbert_head(seq_out, pooled, masks_bks, params, *, packed_cls=None,
               b_tile=None, s_tile=None, head_b_tile=None,
               vmem_limit_bytes=None):
    """RBERT head forward.

    seq_out:   [B, S, H] backbone sequence output (bf16 preferred; cast if not)
    pooled:    [B, H]    backbone pooled output
    masks_bks: [B, 4, S] entity masks e1..e4, already batch-major
    """
    B, S, H = seq_out.shape
    assert masks_bks.shape == (B, 4, S)

    # Stream the mem-bound inputs as bf16 (f32 accumulation inside the MXU).
    seq_s = seq_out if seq_out.dtype == jnp.bfloat16 else seq_out.astype(jnp.bfloat16)
    msk_s = masks_bks if masks_bks.dtype == jnp.bfloat16 else masks_bks.astype(jnp.bfloat16)

    # --- tile selection -------------------------------------------------------
    if b_tile is None:
        # <=8 rows per step, and nb >= 2 when possible so v7x's two TensorCores
        # both get work along the "parallel" batch axis.
        b_tile = _largest_divisor_leq(B, min(8, max(B // 2, 1)))
    if s_tile is None:
        s_tile = _largest_divisor_leq(S, 512)   # ~6 MiB/buffer at H=768 bf16
    assert B % b_tile == 0 and S % s_tile == 0
    nb, ns = B // b_tile, S // s_tile

    if head_b_tile is None:
        head_b_tile = B        # head is tiny; M = B rows in one MXU pass
    assert B % head_b_tile == 0
    assert head_b_tile == B or head_b_tile % 8 == 0
    nbh = B // head_b_tile

    # --- VMEM budget from the actual block math -------------------------------
    if vmem_limit_bytes is None:
        seq_b = b_tile * s_tile * H * seq_s.dtype.itemsize
        msk_b = b_tile * 4 * s_tile * msk_s.dtype.itemsize
        acc_b = b_tile * 4 * H * 4
        stream_need = 2 * (seq_b + msk_b + acc_b)
        w_bytes = (2 * H * H + 5 * H * 4 * LANE) * 4
        head_need = 2 * w_bytes + head_b_tile * (4 * H + 5 * H + 2 * LANE) * 4 * 4
        vmem_limit_bytes = int(min(max(stream_need, head_need, 32 << 20)
                                   + (4 << 20), 96 << 20))

    # --- kernel 1: streamed entity sums ---------------------------------------
    ent_sum = pl.pallas_call(
        entity_sum_kernel,
        out_shape=jax.ShapeDtypeStruct((B, 4, H), jnp.float32),
        grid_spec=pltpu.PrefetchScalarGridSpec(
            num_scalar_prefetch=0,
            grid=(nb, ns),
            in_specs=[
                pl.BlockSpec((b_tile, 4, s_tile), lambda bi, si: (bi, 0, si)),   # masks
                pl.BlockSpec((b_tile, s_tile, H), lambda bi, si: (bi, si, 0)),   # seq
            ],
            out_specs=pl.BlockSpec((b_tile, 4, H), lambda bi, si: (bi, 0, 0)),
            scratch_shapes=[pltpu.VMEM((b_tile, 4, H), jnp.float32)],
        ),
        compiler_params=pltpu.CompilerParams(
            dimension_semantics=("parallel", "arbitrary"),
            vmem_limit_bytes=vmem_limit_bytes),
    )(msk_s, seq_s)

    # --- entity lengths hoisted out of the streamed loop ----------------------
    cnt = jnp.sum(masks_bks != 0, axis=-1).astype(jnp.float32)        # [B, 4]
    inv_len = (1.0 / jnp.maximum(cnt, 1.0))[:, :, None]               # [B, 4, 1]

    # --- packed classifier weights (hoistable / cacheable) --------------------
    if packed_cls is None:
        packed_cls = pack_classifier_params(params)
    w_all, b_all = packed_cls

    # --- kernel 2: head --------------------------------------------------------
    out = pl.pallas_call(
        rbert_head_kernel,
        out_shape=jax.ShapeDtypeStruct((B, 2 * LANE), jnp.float32),
        grid_spec=pltpu.PrefetchScalarGridSpec(
            num_scalar_prefetch=0,
            grid=(nbh,),
            in_specs=[
                pl.BlockSpec((head_b_tile, H), lambda bi: (bi, 0)),          # pooled
                pl.BlockSpec((head_b_tile, 4, H), lambda bi: (bi, 0, 0)),    # ent sums
                pl.BlockSpec((head_b_tile, 4, 1), lambda bi: (bi, 0, 0)),    # 1/len
                pl.BlockSpec((H, H), lambda bi: (0, 0)),                     # w_cls
                pl.BlockSpec((1, H), lambda bi: (0, 0)),                     # b_cls
                pl.BlockSpec((H, H), lambda bi: (0, 0)),                     # w_ent
                pl.BlockSpec((1, H), lambda bi: (0, 0)),                     # b_ent
                pl.BlockSpec((5 * H, 4 * LANE), lambda bi: (0, 0)),          # w_all
                pl.BlockSpec((1, 4 * LANE), lambda bi: (0, 0)),              # b_all
            ],
            out_specs=pl.BlockSpec((head_b_tile, 2 * LANE), lambda bi: (bi, 0)),
            scratch_shapes=[
                pltpu.VMEM((2 * head_b_tile, H), jnp.float32),   # fused e1/e2 rows
                pltpu.VMEM((head_b_tile, 5 * H), jnp.float32),   # concat buffer t
            ],
        ),
        compiler_params=pltpu.CompilerParams(
            dimension_semantics=("parallel",),
            vmem_limit_bytes=vmem_limit_bytes),
    )(pooled.astype(jnp.float32), ent_sum, inv_len,
      params["w_cls"], params["b_cls"], params["w_ent"], params["b_ent"],
      w_all, b_all)

    bin_logits = out[:, :NUM_BIN]
    logits = out[:, LANE:LANE + NUM_LABELS]
    return bin_logits, logits


# ----------------------------------------------------------------------------
# Pure-JAX reference (same forward math) for correctness check.
# ----------------------------------------------------------------------------
def reference(seq_out, pooled, masks_bks, params):
    seq = seq_out.astype(jnp.float32)
    m = masks_bks.astype(jnp.float32)                       # [B, 4, S]
    sums = jnp.einsum('bks,bsh->bkh', m, seq)
    cnt = jnp.sum(m != 0, axis=-1, keepdims=True).astype(jnp.float32)
    avg = sums / jnp.maximum(cnt, 1.0)
    e1, e2, e3, e4 = avg[:, 0], avg[:, 1], avg[:, 2], avg[:, 3]
    pooled_fc = jnp.tanh(pooled) @ params["w_cls"] + params["b_cls"]
    e1_fc = jnp.tanh(e1) @ params["w_ent"] + params["b_ent"]
    e2_fc = jnp.tanh(e2) @ params["w_ent"] + params["b_ent"]
    concat = jnp.concatenate([pooled_fc, e1_fc, e2_fc, e3, e4], axis=-1)
    t = jnp.tanh(concat)
    H = pooled.shape[1]
    w_bin = params["w_bin"].reshape(5 * H, NUM_BIN)
    bin_logits = t @ w_bin + params["b_bin"][0]
    w_lbl = params["w_lbl"].reshape(3, 5 * H, NUM_LABELS)
    all_lgt = jnp.einsum('bf,cfn->cbn', t, w_lbl) + params["b_lbl"][:, 0][:, None, :]
    lab = jnp.argmax(bin_logits, axis=1)
    logits = all_lgt[lab, jnp.arange(t.shape[0])]
    return bin_logits, logits


def init_params(key, hidden):
    ks = jax.random.split(key, 10)
    s = 0.05
    return {
        "w_cls": s * jax.random.normal(ks[0], (hidden, hidden), jnp.float32),
        "b_cls": s * jax.random.normal(ks[1], (1, hidden), jnp.float32),
        "w_ent": s * jax.random.normal(ks[2], (hidden, hidden), jnp.float32),
        "b_ent": s * jax.random.normal(ks[3], (1, hidden), jnp.float32),
        # binary_classifier: FCLayer(5H, 3) -> weight stored as 5 chunks [H, 3]
        "w_bin": s * jax.random.normal(ks[4], (5, hidden, NUM_BIN), jnp.float32),
        "b_bin": s * jax.random.normal(ks[5], (1, NUM_BIN), jnp.float32),
        # label_classifier_{0,1,2}: FCLayer(5H, 30) -> 3*5 chunks [H, 30]
        "w_lbl": s * jax.random.normal(ks[6], (15, hidden, NUM_LABELS), jnp.float32),
        "b_lbl": s * jax.random.normal(ks[7], (3, 1, NUM_LABELS), jnp.float32),
    }


if __name__ == "__main__":
    B, S, H = 2, 8, 32
    key = jax.random.PRNGKey(0)
    k_seq, k_pool, k_par = jax.random.split(key, 3)

    # Synthetic backbone outputs (stand-in for AutoModel sequence/pooled
    # output).  Real backbones emit bf16 activations; the streaming kernel is
    # HBM-bound so we keep seq in bf16 end-to-end.
    seq_out = jax.random.normal(k_seq, (B, S, H), jnp.float32).astype(jnp.bfloat16)
    pooled = jax.random.normal(k_pool, (B, H), jnp.float32)

    # Entity masks e1..e4 already in batch-major [B, 4, S] layout (no per-call
    # transpose); each row has a contiguous span of ones.
    masks = jnp.zeros((B, 4, S), jnp.bfloat16)
    for k in range(4):
        for b in range(B):
            start = (k + b) % (S - 3)
            masks = masks.at[b, k, start:start + 2 + (k % 2)].set(1.0)

    params = init_params(k_par, H)
    packed = pack_classifier_params(params)   # hoisted / cacheable packing

    bin_logits, logits = rbert_head(seq_out, pooled, masks, params,
                                    packed_cls=packed)
    jax.block_until_ready((bin_logits, logits))

    ref_bin, ref_lgt = reference(seq_out, pooled, masks, params)
    assert bin_logits.shape == (B, NUM_BIN) and logits.shape == (B, NUM_LABELS)
    assert jnp.allclose(bin_logits, ref_bin, atol=2e-4, rtol=2e-4)
    assert jnp.allclose(logits, ref_lgt, atol=2e-4, rtol=2e-4)

    print("KERNEL_OK")
</pallas_src>

<mosaic_0001>
module attributes {stable_mosaic.version = 11 : i64} {
  func.func @entity_sum_kernel(%arg0: i32, %arg1: i32, %arg2: memref<1x4x8xbf16, #tpu.memory_space<vmem>>, %arg3: memref<1x8x32xbf16, #tpu.memory_space<vmem>>, %arg4: memref<1x4x32xf32, #tpu.memory_space<vmem>>, %arg5: memref<1x4x32xf32, #tpu.memory_space<vmem>>) attributes {dimension_semantics = [#tpu.dimension_semantics<parallel>, #tpu.dimension_semantics<arbitrary>], iteration_bounds = array<i64: 2, 1>, scalar_prefetch = 0 : i64, scratch_operands = 1 : i64, tpu.core_type = #tpu.core_type<tc>, window_params = [{transform_indices = @transform_0, window_bounds = array<i64: 1, 4, 8>}, {transform_indices = @transform_1, window_bounds = array<i64: 1, 8, 32>}, {transform_indices = @transform_2, window_bounds = array<i64: 1, 4, 32>}]} {
    %c0_i32 = arith.constant 0 : i32
    %0 = arith.cmpi eq, %arg1, %c0_i32 : i32
    %1 = arith.extui %0 : i1 to i32
    %c0_i32_0 = arith.constant 0 : i32
    %2 = arith.cmpi ne, %1, %c0_i32_0 : i32
    scf.if %2 {
      %cst_14 = arith.constant 0.000000e+00 : f32
      %12 = vector.broadcast %cst_14 : f32 to vector<1x4x32xf32>
      %c0_15 = arith.constant 0 : index
      %c0_16 = arith.constant 0 : index
      %c0_17 = arith.constant 0 : index
      %13 = vector.load %arg5[%c0_15, %c0_16, %c0_17] : memref<1x4x32xf32, #tpu.memory_space<vmem>>, vector<1x4x32xf32>
      tpu.vector_store %arg5[%c0_15, %c0_16, %c0_17], %12 {strides = array<i32>} : memref<1x4x32xf32, #tpu.memory_space<vmem>>, vector<1x4x32xf32>,
    } else {
    }
    %c0 = arith.constant 0 : index
    %c0_1 = arith.constant 0 : index
    %c0_2 = arith.constant 0 : index
    %3 = vector.load %arg5[%c0, %c0_1, %c0_2] : memref<1x4x32xf32, #tpu.memory_space<vmem>>, vector<1x4x32xf32>
    %c0_3 = arith.constant 0 : index
    %c0_4 = arith.constant 0 : index
    %c0_5 = arith.constant 0 : index
    %4 = vector.load %arg2[%c0_3, %c0_4, %c0_5] : memref<1x4x8xbf16, #tpu.memory_space<vmem>>, vector<1x4x8xbf16>
    %c0_6 = arith.constant 0 : index
    %c0_7 = arith.constant 0 : index
    %c0_8 = arith.constant 0 : index
    %5 = vector.load %arg3[%c0_6, %c0_7, %c0_8] : memref<1x8x32xbf16, #tpu.memory_space<vmem>>, vector<1x8x32xbf16>
    "tpu.trace_start"() <{level = 10 : i32, message = "bks,bsh->bkh"}> : () -> ()
    %cst = arith.constant dense<0.000000e+00> : vector<1x4x32xf32>
    %6 = tpu.matmul %4, %5, %cst {dimension_numbers = #tpu.dot_dimension_numbers<[2], [1], [1], [2], [0, 0, 0, 1, 1, 2], [0], [0]>} : vector<1x4x8xbf16>, vector<1x8x32xbf16>, vector<1x4x32xf32> -> vector<1x4x32xf32>
    "tpu.trace_stop"() : () -> ()
    %7 = arith.addf %3, %6 : vector<1x4x32xf32>
    %c0_9 = arith.constant 0 : index
    %c0_10 = arith.constant 0 : index
    %c0_11 = arith.constant 0 : index
    %8 = vector.load %arg5[%c0_9, %c0_10, %c0_11] : memref<1x4x32xf32, #tpu.memory_space<vmem>>, vector<1x4x32xf32>
    tpu.vector_store %arg5[%c0_9, %c0_10, %c0_11], %7 {strides = array<i32>} : memref<1x4x32xf32, #tpu.memory_space<vmem>>, vector<1x4x32xf32>,
    %c0_i32_12 = arith.constant 0 : i32
    %9 = arith.cmpi eq, %arg1, %c0_i32_12 : i32
    %10 = arith.extui %9 : i1 to i32
    %c0_i32_13 = arith.constant 0 : i32
    %11 = arith.cmpi ne, %10, %c0_i32_13 : i32
    scf.if %11 {
      %c0_14 = arith.constant 0 : index
      %c0_15 = arith.constant 0 : index
      %c0_16 = arith.constant 0 : index
      %12 = vector.load %arg5[%c0_14, %c0_15, %c0_16] : memref<1x4x32xf32, #tpu.memory_space<vmem>>, vector<1x4x32xf32>
      %c0_17 = arith.constant 0 : index
      %c0_18 = arith.constant 0 : index
      %c0_19 = arith.constant 0 : index
      %13 = vector.load %arg4[%c0_17, %c0_18, %c0_19] : memref<1x4x32xf32, #tpu.memory_space<vmem>>, vector<1x4x32xf32>
      tpu.vector_store %arg4[%c0_17, %c0_18, %c0_19], %12 {strides = array<i32>} : memref<1x4x32xf32, #tpu.memory_space<vmem>>, vector<1x4x32xf32>,
    } else {
    }
    return
  }
  func.func @transform_0(%arg0: i32, %arg1: i32) -> (i32, i32, i32) {
    %c0_i32 = arith.constant 0 : i32
    %c0_i32_0 = arith.constant 0 : i32
    return %arg0, %c0_i32, %arg1 : i32, i32, i32
  }
  func.func @transform_1(%arg0: i32, %arg1: i32) -> (i32, i32, i32) {
    %c0_i32 = arith.constant 0 : i32
    %c0_i32_0 = arith.constant 0 : i32
    return %arg0, %arg1, %c0_i32 : i32, i32, i32
  }
  func.func @transform_2(%arg0: i32, %arg1: i32) -> (i32, i32, i32) {
    %c0_i32 = arith.constant 0 : i32
    %c0_i32_0 = arith.constant 0 : i32
    %c0_i32_1 = arith.constant 0 : i32
    return %arg0, %c0_i32, %c0_i32_0 : i32, i32, i32
  }
}

</mosaic_0001>

<llo_original>
// kernel: tpu_custom_call.1
$region0: #{tpu_custom_call.1}
  #allocation0 [shape = 'u32[]', space=smem, size = 0x4, offset = 0x4, fixed_abs, tag = 'smem constant byte address 0x4 - core index']
  #allocation1 [shape = 'u32[144,128]{1,0:T(1,128)}', space=vmem, size = 0x12000, scoped, tag = 'internal scratch']
  #allocation2 [shape = 'f32[1,4,32]{2,1,0:T(4,128)}', space=vmem, size = 0x800, scoped, tag = 'scratch operand']
  %s0 = inlined_call_operand.hbm [shape: bf16[2,4,8], index: 0, kind: input, shape index: {}]
  %s1 = inlined_call_operand.hbm [shape: bf16[2,8,32], index: 1, kind: input, shape index: {}]
  %s2 = inlined_call_operand.hbm [shape: f32[2,4,32], index: 2, kind: output, shape index: {}]
  %s3 = sld [smem:[#allocation0]]
  $region57: #{tpu_custom_call.1} parent=0
    _
  %s5 = ssub.s32 1, %s3
  %s6 = scalar_select 0, %s5, %s3
  $region1: #{tpu_custom_call.1} parent=0
    #allocation3 [shape = 'u8[2048]{0}', space=vmem, size = 0x800, scoped, tag = 'input window, operand 0']
    #allocation4 [shape = 's32[2]{0}', space=sflag, size = 0x8, scoped, tag = 'scoped memory for tpu_custom_call.1']
    #allocation5 [shape = 's32[2]{0}', space=sflag, size = 0x8, scoped, tag = 'scoped memory for tpu_custom_call.1']
    #allocation6 [shape = 'u8[4096]{0}', space=vmem, size = 0x1000, scoped, tag = 'input window, operand 1']
    #allocation7 [shape = 's32[2]{0}', space=sflag, size = 0x8, scoped, tag = 'scoped memory for tpu_custom_call.1']
    #allocation8 [shape = 'u8[4096]{0}', space=vmem, size = 0x1000, scoped, tag = 'output window, operand 0']
    %7 = vsyncpa [#allocation4], 0
    %s8 = scalar_lea.sflag [#allocation4], 1
    %9 = vsyncpa %s8, 0
    %10 = vsyncpa [#allocation7], 0
    %s11 = scalar_lea.sflag [#allocation7], 1
    %12 = vsyncpa %s11, 0
    %13 = vsyncpa [#allocation5], 0
    %s14 = scalar_lea.sflag [#allocation5], 1
    %15 = vsyncpa %s14, 0
    loop: start=0, step=1, limit=4
    $region2: #{tpu_custom_call.1} parent=1 // loop_pre_header
      _
    $region3: #{tpu_custom_call.1} parent=1 // loop_header
      %s17 = sphi 0, %s21
      %p18 = scmp.ge.s32.totalorder %s17, 4
      %s24 = sphi 0, %s36
      %s25 = sphi 0, %s32
      %s26 = sphi 0, %s24
      %s27 = sphi 0, %s25
      %s28 = sphi 0, %s26
      %s29 = sphi 0, %s27
      %s41 = sphi 0, %s43
      %s44 = sphi 0, %s41
      %s45 = sphi 0, %s44
      %s61 = sphi 0, %s45
      %s69 = sphi 0, %s71
      %s72 = sphi 0, %s69
      %s73 = sphi 0, %s72
      %s89 = sphi 0, %s73
      %s95 = sphi 0, %s97
      %s98 = sphi 0, %s95
      %s99 = sphi 0, %s98
      %s115 = sphi 0, %s99
    $region4: #{tpu_custom_call.1} parent=1 // loop_header_branch
      %20 = sbr.rel (%p18) target = $region8
    $region5: #{tpu_custom_call.1} parent=1 // loop_body
      %s22 = ssub.s32 %s17, 1
      %s23 = ssub.s32 %s17, 2
      %s30 = sadd.s32 1, %s25
      %p31 = scmp.ge.s32.totalorder %s30, 1
      %s32 = scalar_select %p31, 0, %s30
      %s33 = sadd.s32 1, %s24
      %s34 = scalar_select %p31, %s33, %s24
      %p35 = scmp.ge.s32.totalorder %s34, 2
      %s36 = scalar_select %p35, 0, %s34
      %s37 = ssub.s32 %s24, %s36
      %s38 = ssub.s32 %s25, %s32
      %s39 = sor.u32 %s37, %s38
      %p40 = scmp.eq.s32.totalorder %s39, 0
      %s42 = sadd.s32 %s41, 1
      %s43 = scalar_select %p40, %s41, %s42
      %p46 = pneg %p40
      %p47 = scmp.eq.s32.totalorder %s17, 1
      %p48 = por %p46, %p47
      %p49 = scmp.ne.s32.totalorder %s41, %s44
      %p50 = scmp.eq.s32.totalorder %s17, 0
      %p51 = por %p49, %p50
      %p52 = scmp.ne.s32.totalorder %s41, %s44
      %p53 = scmp.eq.s32.totalorder %s22, 1
      %p54 = por %p52, %p53
      %p55 = scmp.ne.s32.totalorder %s44, %s45
      %p56 = scmp.eq.s32.totalorder %s22, 0
      %p57 = por %p55, %p56
      %p58 = scmp.ne.s32.totalorder %s44, %s45
      %p59 = scmp.eq.s32.totalorder %s23, 1
      %p60 = por %p58, %p59
      %p62 = scmp.ne.s32.totalorder %s45, %s61
      %p63 = scmp.eq.s32.totalorder %s23, 0
      %p64 = por %p62, %p63
      %s65 = ssub.s32 %s24, %s36
      %s66 = ssub.s32 %s25, %s32
      %s67 = sor.u32 %s65, %s66
      %p68 = scmp.eq.s32.totalorder %s67, 0
      %s70 = sadd.s32 %s69, 1
      %s71 = scalar_select %p68, %s69, %s70
      %p74 = pneg %p68
      %p75 = scmp.eq.s32.totalorder %s17, 1
      %p76 = por %p74, %p75
      %p77 = scmp.ne.s32.totalorder %s69, %s72
      %p78 = scmp.eq.s32.totalorder %s17, 0
      %p79 = por %p77, %p78
      %p80 = scmp.ne.s32.totalorder %s69, %s72
      %p81 = scmp.eq.s32.totalorder %s22, 1
      %p82 = por %p80, %p81
      %p83 = scmp.ne.s32.totalorder %s72, %s73
      %p84 = scmp.eq.s32.totalorder %s22, 0
      %p85 = por %p83, %p84
      %p86 = scmp.ne.s32.totalorder %s72, %s73
      %p87 = scmp.eq.s32.totalorder %s23, 1
      %p88 = por %p86, %p87
      %p90 = scmp.ne.s32.totalorder %s73, %s89
      %p91 = scmp.eq.s32.totalorder %s23, 0
      %p92 = por %p90, %p91
      %s93 = ssub.s32 %s24, %s36
      %p94 = scmp.eq.s32.totalorder %s93, 0
      %s96 = sadd.s32 %s95, 1
      %s97 = scalar_select %p94, %s95, %s96
      %p100 = pneg %p94
      %p101 = scmp.eq.s32.totalorder %s17, 1
      %p102 = por %p100, %p101
      %p103 = scmp.ne.s32.totalorder %s95, %s98
      %p104 = scmp.eq.s32.totalorder %s17, 0
      %p105 = por %p103, %p104
      %p106 = scmp.ne.s32.totalorder %s95, %s98
      %p107 = scmp.eq.s32.totalorder %s22, 1
      %p108 = por %p106, %p107
      %p109 = scmp.ne.s32.totalorder %s98, %s99
      %p110 = scmp.eq.s32.totalorder %s22, 0
      %p111 = por %p109, %p110
      %p112 = scmp.ne.s32.totalorder %s98, %s99
      %p113 = scmp.eq.s32.totalorder %s23, 1
      %p114 = por %p112, %p113
      %p116 = scmp.ne.s32.totalorder %s99, %s115
      %p117 = scmp.eq.s32.totalorder %s23, 0
      %p118 = por %p116, %p117
      %p119 = scmp.le.s32.totalorder 1, %s17
      %p120 = scmp.lt.s32.totalorder %s17, 3
      %p121 = pnand %p119, %p120
      %p122 = pneg %p121
      // Predicated region
      $region9: #{tpu_custom_call.1} parent=5 // pred_check
        _
      $region10: #{tpu_custom_call.1} parent=5 // pred_check_branch
        %124 = sbr.rel (%p121) target = $region12
      $region11: #{tpu_custom_call.1} parent=5 // pred_region
        %s125 = ssub.s32 %s17, 1
      $region12: #{tpu_custom_call.1} parent=5 // pred_fallthru
        _
      %p126 = scmp.lt.s32.totalorder %s17, 2
      // Predicated region
      $region13: #{tpu_custom_call.1} parent=5 // pred_check
        %p127 = pneg %p126
      $region14: #{tpu_custom_call.1} parent=5 // pred_check_branch
        %129 = sbr.rel (%p127) target = $region16
      $region15: #{tpu_custom_call.1} parent=5 // pred_region
        // Predicated region
        $region17: #{tpu_custom_call.1} parent=15 // pred_check
          %p130 = pneg %p51
        $region18: #{tpu_custom_call.1} parent=15 // pred_check_branch
          %132 = sbr.rel (%p130) target = $region20
        $region19: #{tpu_custom_call.1} parent=15 // pred_region
          %s133 = sand.u32 %s41, 1
          %s134 = scalar_lea.sflag [#allocation4], %s133
          %s135 = sand.u32 %s41, 1
          %s136 = smul.addr %s135, 2
          %s137 = scalar_lea.vmem [#allocation3], %s136
          %s139 = ssub.s32 32, 32
          %140 = vsyncadd %s134, %s139
          %s141 = sadd.s32 %s25, %s24
          %s142 = smul.addr %s141, 32
          %s143 = scalar_lea.hbm %s0, %s142
          %s145 = sshll.u32 %s137, 4
          %s146 = int_to_ptr.vmem [resolvable:$true] %s145
          %148 = dma.hbm_to_vmem [thread:$0]  %s143, 32, %s146, %s134
        $region20: #{tpu_custom_call.1} parent=15 // pred_fallthru
          _
        // Predicated region
        $region21: #{tpu_custom_call.1} parent=15 // pred_check
          %p149 = pneg %p79
        $region22: #{tpu_custom_call.1} parent=15 // pred_check_branch
          %151 = sbr.rel (%p149) target = $region24
        $region23: #{tpu_custom_call.1} parent=15 // pred_region
          %s152 = sand.u32 %s69, 1
          %s153 = scalar_lea.sflag [#allocation7], %s152
          %s154 = sand.u32 %s69, 1
          %s155 = smul.addr %s154, 4
          %s156 = scalar_lea.vmem [#allocation6], %s155
          %s158 = ssub.s32 64, 64
          %159 = vsyncadd %s153, %s158
          %s160 = sadd.s32 %s25, %s24
          %s161 = smul.addr %s160, 64
          %s162 = scalar_lea.hbm %s1, %s161
          %s164 = sshll.u32 %s156, 4
          %s165 = int_to_ptr.vmem [resolvable:$true] %s164
          %167 = dma.hbm_to_vmem [thread:$0]  %s162, 64, %s165, %s153
        $region24: #{tpu_custom_call.1} parent=15 // pred_fallthru
          _
      $region16: #{tpu_custom_call.1} parent=5 // pred_fallthru
        _
      %p168 = scmp.le.s32.totalorder 1, %s17
      %p169 = scmp.lt.s32.totalorder %s17, 3
      %p170 = pnand %p168, %p169
      %p171 = pneg %p170
      // Predicated region
      $region25: #{tpu_custom_call.1} parent=5 // pred_check
        _
      $region26: #{tpu_custom_call.1} parent=5 // pred_check_branch
        %173 = sbr.rel (%p170) target = $region28
      $region27: #{tpu_custom_call.1} parent=5 // pred_region
        %s174 = ssub.s32 %s17, 1
        %s175 = sand.u32 %s44, 1
        %s176 = scalar_lea.sflag [#allocation4], %s175
        %s177 = sand.u32 %s44, 1
        %s178 = smul.addr %s177, 2
        %s179 = scalar_lea.vmem [#allocation3], %s178
        // Predicated region
        $region29: #{tpu_custom_call.1} parent=27 // pred_check
          %p180 = pneg %p57
        $region30: #{tpu_custom_call.1} parent=27 // pred_check_branch
          %182 = sbr.rel (%p180) target = $region32
        $region31: #{tpu_custom_call.1} parent=27 // pred_region
          %183 = dma.done %s176, 32
        $region32: #{tpu_custom_call.1} parent=27 // pred_fallthru
          _
        %s184 = sand.u32 %s72, 1
        %s185 = scalar_lea.sflag [#allocation7], %s184
        %s186 = sand.u32 %s72, 1
        %s187 = smul.addr %s186, 4
        %s188 = scalar_lea.vmem [#allocation6], %s187
        // Predicated region
        $region33: #{tpu_custom_call.1} parent=27 // pred_check
          %p189 = pneg %p85
        $region34: #{tpu_custom_call.1} parent=27 // pred_check_branch
          %191 = sbr.rel (%p189) target = $region36
        $region35: #{tpu_custom_call.1} parent=27 // pred_region
          %192 = dma.done %s185, 64
        $region36: #{tpu_custom_call.1} parent=27 // pred_fallthru
          _
        %s193 = sand.u32 %s44, 1
        %s194 = scalar_lea.sflag [#allocation4], %s193
        %s195 = sand.u32 %s44, 1
        %s196 = smul.addr %s195, 2
        %s197 = scalar_lea.vmem [#allocation3], %s196
        %p198 = pneg %p57
        %p199 = pneg %p54
        %s200 = sand.u32 %s72, 1
        %s201 = scalar_lea.sflag [#allocation7], %s200
        %s202 = sand.u32 %s72, 1
        %s203 = smul.addr %s202, 4
        %s204 = scalar_lea.vmem [#allocation6], %s203
        %p205 = pneg %p85
        %p206 = pneg %p82
        %p207 = pneg %p111
        %p208 = pneg %p108
        %s209 = sand.u32 %s98, 1
        %s210 = scalar_lea.sflag [#allocation5], %s209
        %s211 = sand.u32 %s98, 1
        %s212 = smul.addr %s211, 4
        %s213 = scalar_lea.vmem [#allocation8], %s212
        %p215 = scmp.eq.s32.totalorder %s27, 0
        // Predicated region
        $region37: #{tpu_custom_call.1} parent=27 // pred_check
          %p216 = pneg %p215
        $region38: #{tpu_custom_call.1} parent=27 // pred_check_branch
          %218 = sbr.rel (%p216) target = $region40
        $region39: #{tpu_custom_call.1} parent=27 // pred_region
          %vm219 = vcmask 257024
          %220 = vst.msk [vmem:[#allocation2] sm:$0xf] %vm219, 0.0
        $region40: #{tpu_custom_call.1} parent=27 // pred_fallthru
          _
        %v221 = vld [vmem:[#allocation2] sm:$0xf]
        %v222 = vld [vmem:[%s179] sm:$0x3]
        %v223 = vld [vmem:[%s188] sm:$0xf]
        %vm224 = vcmask 64512
        %v226 = vsel %vm224, %v222, 0
        %vm228 = vcmask 1043456
        %v230 = vsel %vm228, %v223, 0
        %232 = vmatprep.subr.bf16.mxu0 0
        %233 = vmatpush1.bf16.msra.mxu0 0
        %234 = vmatprep.subr.bf16.mxu0 0
        %235 = vmatpush1.bf16.msra.mxu0 0
        %236 = vmatprep.subr.bf16.mxu0 0
        %237 = vmatpush1.bf16.msra.mxu0 0
        %238 = vmatprep.subr.bf16.mxu0 0
        %239 = vmatpush1.bf16.msra.mxu0 0
        %240 = vmatprep.subr.bf16.mxu0 0
        %241 = vmatpush1.bf16.msra.mxu0 0
        %242 = vmatprep.subr.bf16.mxu0 0
        %243 = vmatpush1.bf16.msra.mxu0 0
        %244 = vmatprep.subr.bf16.mxu0 0
        %245 = vmatpush1.bf16.msra.mxu0 0
        %246 = vmatprep.subr.bf16.mxu0 0
        %247 = vmatpush1.bf16.msra.mxu0 %v230
        %248 = vmatprep.subr.bf16.mxu0 0
        %249 = vmatpush2.bf16.msra.mxu0 0
        %250 = vmatprep.subr.bf16.mxu0 0
        %251 = vmatpush2.bf16.msra.mxu0 0
        %252 = vmatprep.subr.bf16.mxu0 0
        %253 = vmatpush2.bf16.msra.mxu0 0
        %254 = vmatprep.subr.bf16.mxu0 0
        %255 = vmatpush2.bf16.msra.mxu0 0
        %256 = vmatprep.subr.bf16.mxu0 0
        %257 = vmatpush2.bf16.msra.mxu0 0
        %258 = vmatprep.subr.bf16.mxu0 0
        %259 = vmatpush2.bf16.msra.mxu0 0
        %260 = vmatprep.subr.bf16.mxu0 0
        %261 = vmatpush2.bf16.msra.mxu0 0
        %262 = vmatprep.subr.bf16.mxu0 0
        %263 = vmatpush2.bf16.msra.mxu0 0
        %264 = vmatprep.mubr.bf16.mxu0 0
        %265 = vmatmul.mubr.bf16.gmra.mxu0 %v226
        %v266 = vpop.f32.mrf.mxu0
        %v267 = vadd.f32 0.0, %v266
        %v268 = vpop.f32.mrf.mxu0
        %v269 = vpop.f32.mrf.mxu0
        %v270 = vpop.f32.mrf.mxu0
        %271 = vdwg.mxu0
        %v272 = vadd.f32 %v221, %v267
        %vm273 = vcmask 257024
        %274 = vst.msk [vmem:[#allocation2] sm:$0xf] %vm273, %v272
        // Predicated region
        $region41: #{tpu_custom_call.1} parent=27 // pred_check
          %p275 = pneg %p215
        $region42: #{tpu_custom_call.1} parent=27 // pred_check_branch
          %277 = sbr.rel (%p275) target = $region44
        $region43: #{tpu_custom_call.1} parent=27 // pred_region
          %v278 = vld [vmem:[#allocation2] sm:$0xf]
          %279 = vst.msk [vmem:[%s213] sm:$0xf] %vm273, %v278
        $region44: #{tpu_custom_call.1} parent=27 // pred_fallthru
          _
        %s280 = sand.u32 %s98, 1
        %s281 = scalar_lea.sflag [#allocation5], %s280
        %s282 = sand.u32 %s98, 1
        %s283 = smul.addr %s282, 4
        %s284 = scalar_lea.vmem [#allocation8], %s283
        // Predicated region
        $region45: #{tpu_custom_call.1} parent=27 // pred_check
          %p285 = pneg %p108
        $region46: #{tpu_custom_call.1} parent=27 // pred_check_branch
          %287 = sbr.rel (%p285) target = $region48
        $region47: #{tpu_custom_call.1} parent=27 // pred_region
          %s289 = ssub.s32 64, 64
          %290 = vsyncadd %s281, %s289
          %s291 = smul.addr %s26, 64
          %s292 = scalar_lea.hbm %s2, %s291
          %s294 = sshll.u32 %s284, 4
          %s295 = int_to_ptr.vmem [resolvable:$true] %s294
          %297 = dma.vmem_to_hbm [thread:$0]  %s295, 64, %s292, %s281
        $region48: #{tpu_custom_call.1} parent=27 // pred_fallthru
          _
      $region28: #{tpu_custom_call.1} parent=5 // pred_fallthru
        _
      %p298 = scmp.le.s32.totalorder 2, %s17
      // Predicated region
      $region49: #{tpu_custom_call.1} parent=5 // pred_check
        %p299 = pneg %p298
      $region50: #{tpu_custom_call.1} parent=5 // pred_check_branch
        %301 = sbr.rel (%p299) target = $region52
      $region51: #{tpu_custom_call.1} parent=5 // pred_region
        %s302 = ssub.s32 %s17, 2
        // Predicated region
        $region53: #{tpu_custom_call.1} parent=51 // pred_check
          %p303 = pneg %p114
        $region54: #{tpu_custom_call.1} parent=51 // pred_check_branch
          %305 = sbr.rel (%p303) target = $region56
        $region55: #{tpu_custom_call.1} parent=51 // pred_region
          %s306 = sand.u32 %s99, 1
          %s307 = scalar_lea.sflag [#allocation5], %s306
          %s308 = sand.u32 %s99, 1
          %s309 = smul.addr %s308, 4
          %s310 = scalar_lea.vmem [#allocation8], %s309
          %311 = dma.done %s307, 64
        $region56: #{tpu_custom_call.1} parent=51 // pred_fallthru
          _
      $region52: #{tpu_custom_call.1} parent=5 // pred_fallthru
        _
    $region6: #{tpu_custom_call.1} parent=1 // loop_footer
      %s21 = sadd.s32 1, %s17
    $region7: #{tpu_custom_call.1} parent=1 // loop_footer_branch
      %16 = sbr.rel target = $region3
    $region8: #{tpu_custom_call.1} parent=1 // loop_exit
      _
    %312 = vsyncpa [#allocation4], 1
    %s313 = scalar_lea.sflag [#allocation4], 1
    %314 = vsyncpa %s313, 1
    %315 = vsyncpa [#allocation7], 1
    %s316 = scalar_lea.sflag [#allocation7], 1
    %317 = vsyncpa %s316, 1
    %318 = vsyncpa [#allocation5], 1
    %s319 = scalar_lea.sflag [#allocation5], 1
    %320 = vsyncpa %s319, 1

</llo_original>
